<compile_context>
chip_gen: v7x
topology: tpu7x:2x2x1
jax: 0.10.0
libtpu: 0.0.40
codegen_flags: <defaults>
</compile_context>

<pallas_src>
import functools

import jax
import jax.numpy as jnp
from jax.experimental import pallas as pl
from jax.experimental.pallas import tpu as pltpu

_LANE = 128            # feature dims padded to multiples of the lane width
_BATCH_GRAIN = 16      # bf16 sublane packing granularity for batch tiles
_MAX_BATCH_TILE = 512  # upper bound on the streamed batch tile
_MIN_GRID = 4          # >= 2 pipelined steps per TensorCore on v7x


def _round_up(n, m):
    return ((n + m - 1) // m) * m


def _pad_to(a, shape):
    pads = [(0, s - d) for d, s in zip(a.shape, shape)]
    if any(p[1] for p in pads):
        a = jnp.pad(a, pads)
    return a


def mlp3_kernel(x_ref, w1_ref, b1_ref, w2_ref, b2_ref, w3_ref, b3_ref, o_ref):
    # x arrives in f32; cast to the weights' dtype in-kernel (VPU work hidden under MXU).
    x = x_ref[...].astype(w1_ref.dtype)
    # layer 1: bf16 MXU matmul, f32 accumulation; f32 bias (1, H1p) broadcasts over rows.
    h1 = jnp.dot(x, w1_ref[...], preferred_element_type=jnp.float32) + b1_ref[...]
    # layers 2/3: re-cast activations to bf16 so every dot stays on the bf16 MXU path.
    h2 = jnp.dot(h1.astype(w2_ref.dtype), w2_ref[...],
                 preferred_element_type=jnp.float32) + b2_ref[...]
    h3 = jnp.dot(h2.astype(w3_ref.dtype), w3_ref[...],
                 preferred_element_type=jnp.float32) + b3_ref[...]
    o_ref[...] = h3.astype(o_ref.dtype)   # single lane-dense store


def prepare_params(params, compute_dtype=jnp.bfloat16):
    """Pad feature dims to lane multiples and cast weights to the MXU dtype ONCE.

    Zero padding is exact: padded rows/cols of W (and padded cols of x) contribute 0 to
    every dot product. Call this at init and reuse the result for every forward call.
    """
    w1, b1 = params["w1"], params["b1"]
    w2, b2 = params["w2"], params["b2"]
    w3, b3 = params["w3"], params["b3"]
    in_dim, h1d = w1.shape
    h2d, out_dim = w2.shape[1], w3.shape[1]
    Dp, H1p, H2p, Op = (_round_up(d, _LANE) for d in (in_dim, h1d, h2d, out_dim))
    return {
        "w1": _pad_to(w1, (Dp, H1p)).astype(compute_dtype),
        "w2": _pad_to(w2, (H1p, H2p)).astype(compute_dtype),
        "w3": _pad_to(w3, (H2p, Op)).astype(compute_dtype),
        "b1": _pad_to(b1.reshape(1, -1), (1, H1p)).astype(jnp.float32),
        "b2": _pad_to(b2.reshape(1, -1), (1, H2p)).astype(jnp.float32),
        "b3": _pad_to(b3.reshape(1, -1), (1, Op)).astype(jnp.float32),
        "in_dim": in_dim,
        "out_dim": out_dim,
    }


def _pick_batch_tile(batch):
    bq = _round_up(batch, _BATCH_GRAIN)
    if bq <= 8 * _BATCH_GRAIN:                 # tiny batch: one tile, no streaming
        return bq, bq
    # Largest 16-row-multiple tile <= _MAX_BATCH_TILE that gives >= _MIN_GRID grid steps,
    # so v7x's two TensorCores each see >= 2 pipelined steps and padding waste stays small.
    tb = min(_MAX_BATCH_TILE, _round_up(pl.cdiv(bq, _MIN_GRID), _BATCH_GRAIN))
    return tb, _round_up(batch, tb)


def _vmem_limit(tb, dp, h1p, h2p, op, out_itemsize):
    # Conservative footprint: double-buffer everything, generous room for intermediates.
    weights = 2 * (dp * h1p + h1p * h2p + h2p * op) + 4 * (h1p + h2p + op)
    stream = 4 * tb * dp + out_itemsize * tb * op
    acts = tb * (6 * h1p + 6 * h2p + 4 * op)
    need = 2 * (weights + stream) + acts
    # Cap at 64 MiB so the request is valid on v7x as well as v5e/v6e.
    return int(min(64 * 2**20, max(2 * need, 32 * 2**20)))


@functools.lru_cache(maxsize=None)
def _build_mlp_call(tb, bp, dp, h1p, h2p, op, out_dtype, single_buffer_weights,
                    vmem_limit_bytes):
    # Weights/biases use a constant block index -> loaded once, VMEM-resident across the
    # batch grid; optionally single-buffered. x/out stream (double-buffered) over batch.
    # TODO(synk): if profiling on v6e shows exposed x-stream DMA, bump the x/out specs to
    # pipeline_mode=pl.Buffered(3).
    resident = {"pipeline_mode": pl.Buffered(1)} if single_buffer_weights else {}
    const2 = lambda i: (0, 0)
    in_specs = [
        pl.BlockSpec((tb, dp), lambda i: (i, 0)),          # x tile streams over batch
        pl.BlockSpec((dp, h1p), const2, **resident),       # w1 resident
        pl.BlockSpec((1, h1p), const2, **resident),        # b1 resident
        pl.BlockSpec((h1p, h2p), const2, **resident),      # w2 resident
        pl.BlockSpec((1, h2p), const2, **resident),        # b2 resident
        pl.BlockSpec((h2p, op), const2, **resident),       # w3 resident
        pl.BlockSpec((1, op), const2, **resident),         # b3 resident
    ]
    flops = 2 * bp * (dp * h1p + h1p * h2p + h2p * op)
    bytes_accessed = (bp * dp * 4
                      + 2 * (dp * h1p + h1p * h2p + h2p * op)
                      + 4 * (h1p + h2p + op)
                      + bp * op * jnp.dtype(out_dtype).itemsize)
    return pl.pallas_call(
        mlp3_kernel,
        out_shape=jax.ShapeDtypeStruct((bp, op), out_dtype),
        grid_spec=pltpu.PrefetchScalarGridSpec(
            num_scalar_prefetch=0,
            grid=(bp // tb,),
            in_specs=in_specs,
            out_specs=pl.BlockSpec((tb, op), lambda i: (i, 0)),
        ),
        compiler_params=pltpu.CompilerParams(
            dimension_semantics=("parallel",),   # batch axis shards across v7x's 2 TCs
            vmem_limit_bytes=vmem_limit_bytes,
        ),
        cost_estimate=pl.CostEstimate(
            flops=flops, transcendentals=0, bytes_accessed=bytes_accessed),
    )


def simple_net_forward(x, prep, *, out_dtype=jnp.float32):
    """x: (batch, in_dim) f32. prep: output of prepare_params. Returns (batch, out_dim)."""
    batch, in_dim = x.shape
    assert in_dim == prep["in_dim"], (in_dim, prep["in_dim"])
    dp, h1p = prep["w1"].shape
    h2p, op = prep["w3"].shape
    out_dim = prep["out_dim"]

    tb, bp = _pick_batch_tile(batch)
    # Skip the pad op entirely when x is already tile-aligned (cast happens in-kernel).
    xp = x if (batch, in_dim) == (bp, dp) else _pad_to(x, (bp, dp))

    vmem = _vmem_limit(tb, dp, h1p, h2p, op, jnp.dtype(out_dtype).itemsize)
    args = (xp, prep["w1"], prep["b1"], prep["w2"], prep["b2"], prep["w3"], prep["b3"])
    try:
        out_padded = _build_mlp_call(tb, bp, dp, h1p, h2p, op, out_dtype,
                                     True, vmem)(*args)
    except Exception:
        # pl.Buffered(1) (single-buffered resident weights) not accepted by this
        # jax/libtpu combination -> fall back to default double-buffered weight blocks.
        out_padded = _build_mlp_call(tb, bp, dp, h1p, h2p, op, out_dtype,
                                     False, vmem)(*args)

    # Strip batch / output-lane padding outside the kernel.
    return out_padded[:batch, :out_dim]


def init_params(key, in_dim, n_hidden_1, n_hidden_2, out_dim):
    """Deterministic init mimicking nn.Linear's uniform(-1/sqrt(fan_in), 1/sqrt(fan_in))."""
    ks = jax.random.split(key, 6)

    def linear(kw, kb, fan_in, fan_out):
        bound = 1.0 / jnp.sqrt(fan_in)
        w = jax.random.uniform(kw, (fan_in, fan_out), jnp.float32, -bound, bound)
        b = jax.random.uniform(kb, (1, fan_out), jnp.float32, -bound, bound)
        return w, b

    w1, b1 = linear(ks[0], ks[1], in_dim, n_hidden_1)
    w2, b2 = linear(ks[2], ks[3], n_hidden_1, n_hidden_2)
    w3, b3 = linear(ks[4], ks[5], n_hidden_2, out_dim)
    return {"w1": w1, "b1": b1, "w2": w2, "b2": b2, "w3": w3, "b3": b3}


if __name__ == "__main__":
    key = jax.random.PRNGKey(0)
    k_x, k_p = jax.random.split(key)

    # Small shapes consistent with the module's forward: (batch, in_dim) input.
    batch, in_dim, n_hidden_1, n_hidden_2, out_dim = 8, 32, 64, 64, 16

    x = jax.random.normal(k_x, (batch, in_dim), jnp.float32)
    params = init_params(k_p, in_dim, n_hidden_1, n_hidden_2, out_dim)
    prep = prepare_params(params)   # pad + cast ONCE, not on every forward call

    out = jax.block_until_ready(simple_net_forward(x, prep))
    assert out.shape == (batch, out_dim)

    # Reference with the same bf16-rounded matmul operands + f32 accumulation
    # (matches the kernel's numerics), plus a looser check vs. the pure-f32 module.
    bf = lambda a: a.astype(jnp.bfloat16).astype(jnp.float32)
    h = bf(x) @ bf(params["w1"]) + params["b1"]
    h = bf(h) @ bf(params["w2"]) + params["b2"]
    ref_bf16 = bf(h) @ bf(params["w3"]) + params["b3"]
    assert jnp.allclose(out, ref_bf16, atol=2e-3, rtol=2e-3), \
        float(jnp.max(jnp.abs(out - ref_bf16)))

    ref_f32 = ((x @ params["w1"] + params["b1"]) @ params["w2"] + params["b2"]) \
              @ params["w3"] + params["b3"]
    assert jnp.allclose(out, ref_f32, atol=3e-2, rtol=3e-2)

    print("KERNEL_OK")
</pallas_src>

<mosaic_0001>
module attributes {stable_mosaic.version = 11 : i64} {
  func.func @mlp3_kernel(%arg0: i32, %arg1: memref<16x128xf32, #tpu.memory_space<vmem>>, %arg2: memref<128x128xbf16, #tpu.memory_space<vmem>>, %arg3: memref<1x128xf32, #tpu.memory_space<vmem>>, %arg4: memref<128x128xbf16, #tpu.memory_space<vmem>>, %arg5: memref<1x128xf32, #tpu.memory_space<vmem>>, %arg6: memref<128x128xbf16, #tpu.memory_space<vmem>>, %arg7: memref<1x128xf32, #tpu.memory_space<vmem>>, %arg8: memref<16x128xf32, #tpu.memory_space<vmem>>) attributes {dimension_semantics = [#tpu.dimension_semantics<parallel>], iteration_bounds = array<i64: 1>, scalar_prefetch = 0 : i64, scratch_operands = 0 : i64, tpu.core_type = #tpu.core_type<tc>, window_params = [{transform_indices = @transform_0, window_bounds = array<i64: 16, 128>}, {pipeline_mode = #tpu.pipeline_mode<synchronous>, transform_indices = @transform_1, window_bounds = array<i64: 128, 128>}, {pipeline_mode = #tpu.pipeline_mode<synchronous>, transform_indices = @transform_2, window_bounds = array<i64: 1, 128>}, {pipeline_mode = #tpu.pipeline_mode<synchronous>, transform_indices = @transform_3, window_bounds = array<i64: 128, 128>}, {pipeline_mode = #tpu.pipeline_mode<synchronous>, transform_indices = @transform_4, window_bounds = array<i64: 1, 128>}, {pipeline_mode = #tpu.pipeline_mode<synchronous>, transform_indices = @transform_5, window_bounds = array<i64: 128, 128>}, {pipeline_mode = #tpu.pipeline_mode<synchronous>, transform_indices = @transform_6, window_bounds = array<i64: 1, 128>}, {transform_indices = @transform_7, window_bounds = array<i64: 16, 128>}]} {
    %c0 = arith.constant 0 : index
    %c0_0 = arith.constant 0 : index
    %0 = vector.load %arg1[%c0, %c0_0] : memref<16x128xf32, #tpu.memory_space<vmem>>, vector<16x128xf32>
    %1 = arith.truncf %0 : vector<16x128xf32> to vector<16x128xbf16>
    %c0_1 = arith.constant 0 : index
    %c0_2 = arith.constant 0 : index
    %2 = vector.load %arg2[%c0_1, %c0_2] : memref<128x128xbf16, #tpu.memory_space<vmem>>, vector<128x128xbf16>
    %cst = arith.constant dense<0.000000e+00> : vector<16x128xf32>
    %3 = tpu.matmul %1, %2, %cst {dimension_numbers = #tpu.dot_dimension_numbers<[1], [0], [0], [1], [0, 0, 1, 1], [], []>} : vector<16x128xbf16>, vector<128x128xbf16>, vector<16x128xf32> -> vector<16x128xf32>
    %c0_3 = arith.constant 0 : index
    %c0_4 = arith.constant 0 : index
    %4 = vector.load %arg3[%c0_3, %c0_4] : memref<1x128xf32, #tpu.memory_space<vmem>>, vector<1x128xf32>
    %5 = vector.broadcast %4 : vector<1x128xf32> to vector<16x128xf32>
    %6 = arith.addf %3, %5 : vector<16x128xf32>
    %7 = arith.truncf %6 : vector<16x128xf32> to vector<16x128xbf16>
    %c0_5 = arith.constant 0 : index
    %c0_6 = arith.constant 0 : index
    %8 = vector.load %arg4[%c0_5, %c0_6] : memref<128x128xbf16, #tpu.memory_space<vmem>>, vector<128x128xbf16>
    %cst_7 = arith.constant dense<0.000000e+00> : vector<16x128xf32>
    %9 = tpu.matmul %7, %8, %cst_7 {dimension_numbers = #tpu.dot_dimension_numbers<[1], [0], [0], [1], [0, 0, 1, 1], [], []>} : vector<16x128xbf16>, vector<128x128xbf16>, vector<16x128xf32> -> vector<16x128xf32>
    %c0_8 = arith.constant 0 : index
    %c0_9 = arith.constant 0 : index
    %10 = vector.load %arg5[%c0_8, %c0_9] : memref<1x128xf32, #tpu.memory_space<vmem>>, vector<1x128xf32>
    %11 = vector.broadcast %10 : vector<1x128xf32> to vector<16x128xf32>
    %12 = arith.addf %9, %11 : vector<16x128xf32>
    %13 = arith.truncf %12 : vector<16x128xf32> to vector<16x128xbf16>
    %c0_10 = arith.constant 0 : index
    %c0_11 = arith.constant 0 : index
    %14 = vector.load %arg6[%c0_10, %c0_11] : memref<128x128xbf16, #tpu.memory_space<vmem>>, vector<128x128xbf16>
    %cst_12 = arith.constant dense<0.000000e+00> : vector<16x128xf32>
    %15 = tpu.matmul %13, %14, %cst_12 {dimension_numbers = #tpu.dot_dimension_numbers<[1], [0], [0], [1], [0, 0, 1, 1], [], []>} : vector<16x128xbf16>, vector<128x128xbf16>, vector<16x128xf32> -> vector<16x128xf32>
    %c0_13 = arith.constant 0 : index
    %c0_14 = arith.constant 0 : index
    %16 = vector.load %arg7[%c0_13, %c0_14] : memref<1x128xf32, #tpu.memory_space<vmem>>, vector<1x128xf32>
    %17 = vector.broadcast %16 : vector<1x128xf32> to vector<16x128xf32>
    %18 = arith.addf %15, %17 : vector<16x128xf32>
    %c0_15 = arith.constant 0 : index
    %c0_16 = arith.constant 0 : index
    %19 = vector.load %arg8[%c0_15, %c0_16] : memref<16x128xf32, #tpu.memory_space<vmem>>, vector<16x128xf32>
    tpu.vector_store %arg8[%c0_15, %c0_16], %18 {strides = array<i32>} : memref<16x128xf32, #tpu.memory_space<vmem>>, vector<16x128xf32>,
    return
  }
  func.func @transform_0(%arg0: i32) -> (i32, i32) {
    %c0_i32 = arith.constant 0 : i32
    %c0_i32_0 = arith.constant 0 : i32
    return %arg0, %c0_i32 : i32, i32
  }
  func.func @transform_1(%arg0: i32) -> (i32, i32) {
    %c0_i32 = arith.constant 0 : i32
    %c0_i32_0 = arith.constant 0 : i32
    %c0_i32_1 = arith.constant 0 : i32
    return %c0_i32, %c0_i32_0 : i32, i32
  }
  func.func @transform_2(%arg0: i32) -> (i32, i32) {
    %c0_i32 = arith.constant 0 : i32
    %c0_i32_0 = arith.constant 0 : i32
    %c0_i32_1 = arith.constant 0 : i32
    return %c0_i32, %c0_i32_0 : i32, i32
  }
  func.func @transform_3(%arg0: i32) -> (i32, i32) {
    %c0_i32 = arith.constant 0 : i32
    %c0_i32_0 = arith.constant 0 : i32
    %c0_i32_1 = arith.constant 0 : i32
    return %c0_i32, %c0_i32_0 : i32, i32
  }
  func.func @transform_4(%arg0: i32) -> (i32, i32) {
    %c0_i32 = arith.constant 0 : i32
    %c0_i32_0 = arith.constant 0 : i32
    %c0_i32_1 = arith.constant 0 : i32
    return %c0_i32, %c0_i32_0 : i32, i32
  }
  func.func @transform_5(%arg0: i32) -> (i32, i32) {
    %c0_i32 = arith.constant 0 : i32
    %c0_i32_0 = arith.constant 0 : i32
    %c0_i32_1 = arith.constant 0 : i32
    return %c0_i32, %c0_i32_0 : i32, i32
  }
  func.func @transform_6(%arg0: i32) -> (i32, i32) {
    %c0_i32 = arith.constant 0 : i32
    %c0_i32_0 = arith.constant 0 : i32
    %c0_i32_1 = arith.constant 0 : i32
    return %c0_i32, %c0_i32_0 : i32, i32
  }
  func.func @transform_7(%arg0: i32) -> (i32, i32) {
    %c0_i32 = arith.constant 0 : i32
    %c0_i32_0 = arith.constant 0 : i32
    return %arg0, %c0_i32 : i32, i32
  }
}

module attributes {stable_mosaic.version = 11 : i64} {
  func.func @mlp3_kernel(%arg0: i32, %arg1: memref<16x128xf32, #tpu.memory_space<vmem>>, %arg2: memref<128x128xbf16, #tpu.memory_space<vmem>>, %arg3: memref<1x128xf32, #tpu.memory_space<vmem>>, %arg4: memref<128x128xbf16, #tpu.memory_space<vmem>>, %arg5: memref<1x128xf32, #tpu.memory_space<vmem>>, %arg6: memref<128x128xbf16, #tpu.memory_space<vmem>>, %arg7: memref<1x128xf32, #tpu.memory_space<vmem>>, %arg8: memref<16x128xf32, #tpu.memory_space<vmem>>) attributes {dimension_semantics = [#tpu.dimension_semantics<parallel>], iteration_bounds = array<i64: 1>, scalar_prefetch = 0 : i64, scratch_operands = 0 : i64, tpu.core_type = #tpu.core_type<tc>, window_params = [{transform_indices = @transform_0, window_bounds = array<i64: 16, 128>}, {pipeline_mode = #tpu.pipeline_mode<synchronous>, transform_indices = @transform_1, window_bounds = array<i64: 128, 128>}, {pipeline_mode = #tpu.pipeline_mode<synchronous>, transform_indices = @transform_2, window_bounds = array<i64: 1, 128>}, {pipeline_mode = #tpu.pipeline_mode<synchronous>, transform_indices = @transform_3, window_bounds = array<i64: 128, 128>}, {pipeline_mode = #tpu.pipeline_mode<synchronous>, transform_indices = @transform_4, window_bounds = array<i64: 1, 128>}, {pipeline_mode = #tpu.pipeline_mode<synchronous>, transform_indices = @transform_5, window_bounds = array<i64: 128, 128>}, {pipeline_mode = #tpu.pipeline_mode<synchronous>, transform_indices = @transform_6, window_bounds = array<i64: 1, 128>}, {transform_indices = @transform_7, window_bounds = array<i64: 16, 128>}]} {
    %c0 = arith.constant 0 : index
    %c0_0 = arith.constant 0 : index
    %0 = vector.load %arg1[%c0, %c0_0] : memref<16x128xf32, #tpu.memory_space<vmem>>, vector<16x128xf32>
    %1 = arith.truncf %0 : vector<16x128xf32> to vector<16x128xbf16>
    %c0_1 = arith.constant 0 : index
    %c0_2 = arith.constant 0 : index
    %2 = vector.load %arg2[%c0_1, %c0_2] : memref<128x128xbf16, #tpu.memory_space<vmem>>, vector<128x128xbf16>
    %cst = arith.constant dense<0.000000e+00> : vector<16x128xf32>
    %3 = tpu.matmul %1, %2, %cst {dimension_numbers = #tpu.dot_dimension_numbers<[1], [0], [0], [1], [0, 0, 1, 1], [], []>} : vector<16x128xbf16>, vector<128x128xbf16>, vector<16x128xf32> -> vector<16x128xf32>
    %c0_3 = arith.constant 0 : index
    %c0_4 = arith.constant 0 : index
    %4 = vector.load %arg3[%c0_3, %c0_4] : memref<1x128xf32, #tpu.memory_space<vmem>>, vector<1x128xf32>
    %5 = vector.broadcast %4 : vector<1x128xf32> to vector<16x128xf32>
    %6 = arith.addf %3, %5 : vector<16x128xf32>
    %7 = arith.truncf %6 : vector<16x128xf32> to vector<16x128xbf16>
    %c0_5 = arith.constant 0 : index
    %c0_6 = arith.constant 0 : index
    %8 = vector.load %arg4[%c0_5, %c0_6] : memref<128x128xbf16, #tpu.memory_space<vmem>>, vector<128x128xbf16>
    %cst_7 = arith.constant dense<0.000000e+00> : vector<16x128xf32>
    %9 = tpu.matmul %7, %8, %cst_7 {dimension_numbers = #tpu.dot_dimension_numbers<[1], [0], [0], [1], [0, 0, 1, 1], [], []>} : vector<16x128xbf16>, vector<128x128xbf16>, vector<16x128xf32> -> vector<16x128xf32>
    %c0_8 = arith.constant 0 : index
    %c0_9 = arith.constant 0 : index
    %10 = vector.load %arg5[%c0_8, %c0_9] : memref<1x128xf32, #tpu.memory_space<vmem>>, vector<1x128xf32>
    %11 = vector.broadcast %10 : vector<1x128xf32> to vector<16x128xf32>
    %12 = arith.addf %9, %11 : vector<16x128xf32>
    %13 = arith.truncf %12 : vector<16x128xf32> to vector<16x128xbf16>
    %c0_10 = arith.constant 0 : index
    %c0_11 = arith.constant 0 : index
    %14 = vector.load %arg6[%c0_10, %c0_11] : memref<128x128xbf16, #tpu.memory_space<vmem>>, vector<128x128xbf16>
    %cst_12 = arith.constant dense<0.000000e+00> : vector<16x128xf32>
    %15 = tpu.matmul %13, %14, %cst_12 {dimension_numbers = #tpu.dot_dimension_numbers<[1], [0], [0], [1], [0, 0, 1, 1], [], []>} : vector<16x128xbf16>, vector<128x128xbf16>, vector<16x128xf32> -> vector<16x128xf32>
    %c0_13 = arith.constant 0 : index
    %c0_14 = arith.constant 0 : index
    %16 = vector.load %arg7[%c0_13, %c0_14] : memref<1x128xf32, #tpu.memory_space<vmem>>, vector<1x128xf32>
    %17 = vector.broadcast %16 : vector<1x128xf32> to vector<16x128xf32>
    %18 = arith.addf %15, %17 : vector<16x128xf32>
    %c0_15 = arith.constant 0 : index
    %c0_16 = arith.constant 0 : index
    %19 = vector.load %arg8[%c0_15, %c0_16] : memref<16x128xf32, #tpu.memory_space<vmem>>, vector<16x128xf32>
    tpu.vector_store %arg8[%c0_15, %c0_16], %18 {strides = array<i32>} : memref<16x128xf32, #tpu.memory_space<vmem>>, vector<16x128xf32>,
    return
  }
  func.func @transform_0(%arg0: i32) -> (i32, i32) {
    %c0_i32 = arith.constant 0 : i32
    %c0_i32_0 = arith.constant 0 : i32
    return %arg0, %c0_i32 : i32, i32
  }
  func.func @transform_1(%arg0: i32) -> (i32, i32) {
    %c0_i32 = arith.constant 0 : i32
    %c0_i32_0 = arith.constant 0 : i32
    %c0_i32_1 = arith.constant 0 : i32
    return %c0_i32, %c0_i32_0 : i32, i32
  }
  func.func @transform_2(%arg0: i32) -> (i32, i32) {
    %c0_i32 = arith.constant 0 : i32
    %c0_i32_0 = arith.constant 0 : i32
    %c0_i32_1 = arith.constant 0 : i32
    return %c0_i32, %c0_i32_0 : i32, i32
  }
  func.func @transform_3(%arg0: i32) -> (i32, i32) {
    %c0_i32 = arith.constant 0 : i32
    %c0_i32_0 = arith.constant 0 : i32
    %c0_i32_1 = arith.constant 0 : i32
    return %c0_i32, %c0_i32_0 : i32, i32
  }
  func.func @transform_4(%arg0: i32) -> (i32, i32) {
    %c0_i32 = arith.constant 0 : i32
    %c0_i32_0 = arith.constant 0 : i32
    %c0_i32_1 = arith.constant 0 : i32
    return %c0_i32, %c0_i32_0 : i32, i32
  }
  func.func @transform_5(%arg0: i32) -> (i32, i32) {
    %c0_i32 = arith.constant 0 : i32
    %c0_i32_0 = arith.constant 0 : i32
    %c0_i32_1 = arith.constant 0 : i32
    return %c0_i32, %c0_i32_0 : i32, i32
  }
  func.func @transform_6(%arg0: i32) -> (i32, i32) {
    %c0_i32 = arith.constant 0 : i32
    %c0_i32_0 = arith.constant 0 : i32
    %c0_i32_1 = arith.constant 0 : i32
    return %c0_i32, %c0_i32_0 : i32, i32
  }
  func.func @transform_7(%arg0: i32) -> (i32, i32) {
    %c0_i32 = arith.constant 0 : i32
    %c0_i32_0 = arith.constant 0 : i32
    return %arg0, %c0_i32 : i32, i32
  }
}

</mosaic_0001>

<llo_original>
// kernel: tpu_custom_call.1
$region0: #{tpu_custom_call.1}
  #allocation0 [shape = 'u32[]', space=smem, size = 0x4, offset = 0x4, fixed_abs, tag = 'smem constant byte address 0x4 - core index']
  #allocation1 [shape = 'u32[144,128]{1,0:T(1,128)}', space=vmem, size = 0x12000, scoped, tag = 'internal scratch']
  %s0 = inlined_call_operand.hbm [shape: f32[16,128], index: 0, kind: input, shape index: {}]
  %s1 = inlined_call_operand.hbm [shape: bf16[128,128], index: 1, kind: input, shape index: {}]
  %s2 = inlined_call_operand.vmem [shape: f32[1,128], index: 2, kind: input, shape index: {}]
  %s3 = inlined_call_operand.hbm [shape: bf16[128,128], index: 3, kind: input, shape index: {}]
  %s4 = inlined_call_operand.vmem [shape: f32[1,128], index: 4, kind: input, shape index: {}]
  %s5 = inlined_call_operand.hbm [shape: bf16[128,128], index: 5, kind: input, shape index: {}]
  %s6 = inlined_call_operand.vmem [shape: f32[1,128], index: 6, kind: input, shape index: {}]
  %s7 = inlined_call_operand.hbm [shape: f32[16,128], index: 7, kind: output, shape index: {}]
  %s8 = sld [smem:[#allocation0]]
  $region54: #{tpu_custom_call.1} parent=0
    _
  %s10 = ssub.s32 1, %s8
  %s11 = scalar_select 0, %s10, %s8
  $region1: #{tpu_custom_call.1} parent=0
    #allocation2 [shape = 'u8[8192]{0}', space=vmem, size = 0x2000, scoped, tag = 'input window, operand 0, single buffered']
    #allocation3 [shape = 's32[1]{0}', space=sflag, size = 0x4, scoped, tag = 'scoped memory for tpu_custom_call.1']
    #allocation4 [shape = 's32[1]{0}', space=sflag, size = 0x4, scoped, tag = 'scoped memory for tpu_custom_call.1']
    #allocation5 [shape = 'u8[32768]{0}', space=vmem, size = 0x8000, scoped, tag = 'input window, operand 1, single buffered']
    #allocation6 [shape = 's32[1]{0}', space=sflag, size = 0x4, scoped, tag = 'scoped memory for tpu_custom_call.1']
    #allocation7 [shape = 'u8[32768]{0}', space=vmem, size = 0x8000, scoped, tag = 'input window, operand 3, single buffered']
    #allocation8 [shape = 'u8[32768]{0}', space=vmem, size = 0x8000, scoped, tag = 'input window, operand 5, single buffered']
    #allocation9 [shape = 's32[1]{0}', space=sflag, size = 0x4, scoped, tag = 'scoped memory for tpu_custom_call.1']
    #allocation10 [shape = 'u8[8192]{0}', space=vmem, size = 0x2000, scoped, tag = 'output window, operand 0, single buffered']
    %12 = vsyncpa [#allocation3], 0
    %13 = vsyncpa [#allocation6], 0
    %14 = vsyncpa [#allocation9], 0
    %15 = vsyncpa [#allocation4], 0
    // Predicated region
    $region2: #{tpu_custom_call.1} parent=1 // pred_check
      _
    $region3: #{tpu_custom_call.1} parent=1 // pred_check_branch
      %17 = sbr.rel (0) target = $region5
    $region4: #{tpu_custom_call.1} parent=1 // pred_region
      %s19 = ssub.s32 256, 256
      %20 = vsyncadd [#allocation3], %s19
      %s21 = sshll.u32 [#allocation2], 4
      %s22 = int_to_ptr.vmem [resolvable:$true] %s21
      %27 = dma.hbm_to_vmem [thread:$0]  %s0, 256, %s22, [#allocation3], 128, 128, 8
    $region5: #{tpu_custom_call.1} parent=1 // pred_fallthru
      _
    // Predicated region
    $region6: #{tpu_custom_call.1} parent=1 // pred_check
      _
    $region7: #{tpu_custom_call.1} parent=1 // pred_check_branch
      %29 = sbr.rel (0) target = $region9
    $region8: #{tpu_custom_call.1} parent=1 // pred_region
      %s31 = ssub.s32 1024, 1024
      %32 = vsyncadd [#allocation6], %s31
      %s33 = sshll.u32 [#allocation5], 4
      %s34 = int_to_ptr.vmem [resolvable:$true] %s33
      %39 = dma.hbm_to_vmem [thread:$0]  %s1, 1024, %s34, [#allocation6], 64, 64, 4
    $region9: #{tpu_custom_call.1} parent=1 // pred_fallthru
      _
    // Predicated region
    $region10: #{tpu_custom_call.1} parent=1 // pred_check
      _
    $region11: #{tpu_custom_call.1} parent=1 // pred_check_branch
      %41 = sbr.rel (0) target = $region13
    $region12: #{tpu_custom_call.1} parent=1 // pred_region
      _
    $region13: #{tpu_custom_call.1} parent=1 // pred_fallthru
      _
    // Predicated region
    $region14: #{tpu_custom_call.1} parent=1 // pred_check
      _
    $region15: #{tpu_custom_call.1} parent=1 // pred_check_branch
      %43 = sbr.rel (0) target = $region17
    $region16: #{tpu_custom_call.1} parent=1 // pred_region
      %s45 = ssub.s32 1024, 1024
      %46 = vsyncadd [#allocation6], %s45
      %s47 = sshll.u32 [#allocation7], 4
      %s48 = int_to_ptr.vmem [resolvable:$true] %s47
      %53 = dma.hbm_to_vmem [thread:$0]  %s3, 1024, %s48, [#allocation6], 64, 64, 4
    $region17: #{tpu_custom_call.1} parent=1 // pred_fallthru
      _
    // Predicated region
    $region18: #{tpu_custom_call.1} parent=1 // pred_check
      _
    $region19: #{tpu_custom_call.1} parent=1 // pred_check_branch
      %55 = sbr.rel (0) target = $region21
    $region20: #{tpu_custom_call.1} parent=1 // pred_region
      _
    $region21: #{tpu_custom_call.1} parent=1 // pred_fallthru
      _
    // Predicated region
    $region22: #{tpu_custom_call.1} parent=1 // pred_check
      _
    $region23: #{tpu_custom_call.1} parent=1 // pred_check_branch
      %57 = sbr.rel (0) target = $region25
    $region24: #{tpu_custom_call.1} parent=1 // pred_region
      %s59 = ssub.s32 1024, 1024
      %60 = vsyncadd [#allocation9], %s59
      %s61 = sshll.u32 [#allocation8], 4
      %s62 = int_to_ptr.vmem [resolvable:$true] %s61
      %67 = dma.hbm_to_vmem [thread:$0]  %s5, 1024, %s62, [#allocation9], 64, 64, 4
    $region25: #{tpu_custom_call.1} parent=1 // pred_fallthru
      _
    // Predicated region
    $region26: #{tpu_custom_call.1} parent=1 // pred_check
      _
    $region27: #{tpu_custom_call.1} parent=1 // pred_check_branch
      %69 = sbr.rel (0) target = $region29
    $region28: #{tpu_custom_call.1} parent=1 // pred_region
      _
    $region29: #{tpu_custom_call.1} parent=1 // pred_fallthru
      _
    // Predicated region
    $region30: #{tpu_custom_call.1} parent=1 // pred_check
      _
    $region31: #{tpu_custom_call.1} parent=1 // pred_check_branch
      %71 = sbr.rel (0) target = $region33
    $region32: #{tpu_custom_call.1} parent=1 // pred_region
      %72 = dma.done [#allocation3], 256
    $region33: #{tpu_custom_call.1} parent=1 // pred_fallthru
      _
    // Predicated region
    $region34: #{tpu_custom_call.1} parent=1 // pred_check
      _
    $region35: #{tpu_custom_call.1} parent=1 // pred_check_branch
      %74 = sbr.rel (0) target = $region37
    $region36: #{tpu_custom_call.1} parent=1 // pred_region
      %75 = dma.done [#allocation6], 1024
    $region37: #{tpu_custom_call.1} parent=1 // pred_fallthru
      _
    // Predicated region
    $region38: #{tpu_custom_call.1} parent=1 // pred_check
      _
    $region39: #{tpu_custom_call.1} parent=1 // pred_check_branch
      %77 = sbr.rel (0) target = $region41
    $region40: #{tpu_custom_call.1} parent=1 // pred_region
      %78 = dma.done [#allocation6], 1024
    $region41: #{tpu_custom_call.1} parent=1 // pred_fallthru
      _
    // Predicated region
    $region42: #{tpu_custom_call.1} parent=1 // pred_check
      _
    $region43: #{tpu_custom_call.1} parent=1 // pred_check_branch
      %80 = sbr.rel (0) target = $region45
    $region44: #{tpu_custom_call.1} parent=1 // pred_region
      %81 = dma.done [#allocation9], 1024
    $region45: #{tpu_custom_call.1} parent=1 // pred_fallthru
      _
    %v83 = vld [vmem:[#allocation2] sm:$0xff]
    %v84 = vld [vmem:[#allocation2 + $0x8] sm:$0xff]
    %v85 = vpack.c.bf16 %v84, %v83
    %v86 = vld [vmem:[#allocation5] sm:$0xf]
    %v87 = vld [vmem:[#allocation5 + $0x4] sm:$0xf]
    %v88 = vld [vmem:[#allocation5 + $0x8] sm:$0xf]
    %v89 = vld [vmem:[#allocation5 + $0xc] sm:$0xf]
    %v90 = vld [vmem:[#allocation5 + $0x10] sm:$0xf]
    %v91 = vld [vmem:[#allocation5 + $0x14] sm:$0xf]
    %v92 = vld [vmem:[#allocation5 + $0x18] sm:$0xf]
    %v93 = vld [vmem:[#allocation5 + $0x1c] sm:$0xf]
    %v94 = vld [vmem:[#allocation5 + $0x20] sm:$0xf]
    %v95 = vld [vmem:[#allocation5 + $0x24] sm:$0xf]
    %v96 = vld [vmem:[#allocation5 + $0x28] sm:$0xf]
    %v97 = vld [vmem:[#allocation5 + $0x2c] sm:$0xf]
    %v98 = vld [vmem:[#allocation5 + $0x30] sm:$0xf]
    %v99 = vld [vmem:[#allocation5 + $0x34] sm:$0xf]
    %v100 = vld [vmem:[#allocation5 + $0x38] sm:$0xf]
    %v101 = vld [vmem:[#allocation5 + $0x3c] sm:$0xf]
    %v102 = vld [vmem:[%s2] sm:$0x1]
    %v104 = vlaneseq
    %v105 = vshrl.u32 %v104, 7
    %v106 = vsub.s32 0, %v105
    %v107 = vrot.slane %v102, %v106
    %v125 = vunpack.c.l.b16 %v86
    %v126 = vunpack.c.l.b16 %v87
    %v127 = vunpack.c.l.b16 %v88
    %v128 = vunpack.c.l.b16 %v89
    %v129 = vunpack.c.l.b16 %v90
    %v130 = vunpack.c.l.b16 %v91
    %v131 = vunpack.c.l.b16 %v92
    %v132 = vunpack.c.l.b16 %v93
    %v133 = vunpack.c.l.b16 %v94
    %v134 = vunpack.c.l.b16 %v95
    %v135 = vunpack.c.l.b16 %v96
    %v136 = vunpack.c.l.b16 %v97
    %v137 = vunpack.c.l.b16 %v98
    %v138 = vunpack.c.l.b16 %v99
    %v139 = vunpack.c.l.b16 %v100
    %v140 = vunpack.c.l.b16 %v101
    %v141 = vpack.c.b16 %v126, %v125
    %v142 = vpack.c.b16 %v128, %v127
    %v143 = vpack.c.b16 %v130, %v129
    %v144 = vpack.c.b16 %v132, %v131
    %v145 = vpack.c.b16 %v134, %v133
    %v146 = vpack.c.b16 %v136, %v135
    %v147 = vpack.c.b16 %v138, %v137
    %v148 = vpack.c.b16 %v140, %v139
    %157 = vmatprep.subr.bf16.mxu0 0
    %158 = vmatpush1.bf16.msra.mxu0 %v141
    %159 = vmatprep.subr.bf16.mxu0 0
    %160 = vmatpush1.bf16.msra.mxu0 %v142
    %161 = vmatprep.subr.bf16.mxu0 0
    %162 = vmatpush1.bf16.msra.mxu0 %v143
    %163 = vmatprep.subr.bf16.mxu0 0
    %164 = vmatpush1.bf16.msra.mxu0 %v144
    %165 = vmatprep.subr.bf16.mxu0 0
    %166 = vmatpush1.bf16.msra.mxu0 %v145
    %167 = vmatprep.subr.bf16.mxu0 0
    %168 = vmatpush1.bf16.msra.mxu0 %v146
    %169 = vmatprep.subr.bf16.mxu0 0
    %170 = vmatpush1.bf16.msra.mxu0 %v147
    %171 = vmatprep.subr.bf16.mxu0 0
    %172 = vmatpush1.bf16.msra.mxu0 %v148
    %173 = vmatprep.subr.bf16.mxu0 0
    %174 = vmatpush1.bf16.msra.mxu0 0
    %175 = vmatprep.subr.bf16.mxu0 0
    %176 = vmatpush1.bf16.msra.mxu0 0
    %177 = vmatprep.subr.bf16.mxu0 0
    %178 = vmatpush1.bf16.msra.mxu0 0
    %179 = vmatprep.subr.bf16.mxu0 0
    %180 = vmatpush1.bf16.msra.mxu0 0
    %181 = vmatprep.subr.bf16.mxu0 0
    %182 = vmatpush1.bf16.msra.mxu0 0
    %183 = vmatprep.subr.bf16.mxu0 0
    %184 = vmatpush1.bf16.msra.mxu0 0
    %185 = vmatprep.subr.bf16.mxu0 0
    %186 = vmatpush1.bf16.msra.mxu0 0
    %187 = vmatprep.subr.bf16.mxu0 0
    %188 = vmatpush1.bf16.msra.mxu0 0
    %189 = vmatprep.mubr.bf16.mxu0 0
    %190 = vmatmul.mubr.bf16.gmra.mrb[0].mxu0 %v85
    %v191 = vpop.f32.mrb[0].mxu0
    %v192 = vadd.f32 %v107, %v191
    %v193 = vpop.f32.mrb[0].mxu0
    %v194 = vpop.f32.mrb[0].mxu0
    %v195 = vadd.f32 %v107, %v194
    %v196 = vpop.f32.mrb[0].mxu0
    %197 = vdwg.mxu0
    %v198 = vpack.c.bf16 %v195, %v192
    %v199 = vld [vmem:[#allocation7] sm:$0xf]
    %v200 = vld [vmem:[#allocation7 + $0x4] sm:$0xf]
    %v201 = vld [vmem:[#allocation7 + $0x8] sm:$0xf]
    %v202 = vld [vmem:[#allocation7 + $0xc] sm:$0xf]
    %v203 = vld [vmem:[#allocation7 + $0x10] sm:$0xf]
    %v204 = vld [vmem:[#allocation7 + $0x14] sm:$0xf]
    %v205 = vld [vmem:[#allocation7 + $0x18] sm:$0xf]
    %v206 = vld [vmem:[#allocation7 + $0x1c] sm:$0xf]
    %v207 = vld [vmem:[#allocation7 + $0x20] sm:$0xf]
    %v208 = vld [vmem:[#allocation7 + $0x24] sm:$0xf]
    %v209 = vld [vmem:[#allocation7 + $0x28] sm:$0xf]
    %v210 = vld [vmem:[#allocation7 + $0x2c] sm:$0xf]
    %v211 = vld [vmem:[#allocation7 + $0x30] sm:$0xf]
    %v212 = vld [vmem:[#allocation7 + $0x34] sm:$0xf]
    %v213 = vld [vmem:[#allocation7 + $0x38] sm:$0xf]
    %v214 = vld [vmem:[#allocation7 + $0x3c] sm:$0xf]
    %v215 = vld [vmem:[%s4] sm:$0x1]
    %v217 = vlaneseq
    %v218 = vshrl.u32 %v217, 7
    %v219 = vsub.s32 0, %v218
    %v220 = vrot.slane %v215, %v219
    %v238 = vunpack.c.l.b16 %v199
    %v239 = vunpack.c.l.b16 %v200
    %v240 = vunpack.c.l.b16 %v201
    %v241 = vunpack.c.l.b16 %v202
    %v242 = vunpack.c.l.b16 %v203
    %v243 = vunpack.c.l.b16 %v204
    %v244 = vunpack.c.l.b16 %v205
    %v245 = vunpack.c.l.b16 %v206
    %v246 = vunpack.c.l.b16 %v207
    %v247 = vunpack.c.l.b16 %v208
    %v248 = vunpack.c.l.b16 %v209
    %v249 = vunpack.c.l.b16 %v210
    %v250 = vunpack.c.l.b16 %v211
    %v251 = vunpack.c.l.b16 %v212
    %v252 = vunpack.c.l.b16 %v213
    %v253 = vunpack.c.l.b16 %v214
    %v254 = vpack.c.b16 %v239, %v238
    %v255 = vpack.c.b16 %v241, %v240
    %v256 = vpack.c.b16 %v243, %v242
    %v257 = vpack.c.b16 %v245, %v244
    %v258 = vpack.c.b16 %v247, %v246
    %v259 = vpack.c.b16 %v249, %v248
    %v260 = vpack.c.b16 %v251, %v250
    %v261 = vpack.c.b16 %v253, %v252
    %270 = vmatprep.subr.bf16.mxu0 0
    %271 = vmatpush1.bf16.msra.mxu0 %v254
    %272 = vmatprep.subr.bf16.mxu0 0
    %273 = vmatpush1.bf16.msra.mxu0 %v255
    %274 = vmatprep.subr.bf16.mxu0 0
    %275 = vmatpush1.bf16.msra.mxu0 %v256
    %276 = vmatprep.subr.bf16.mxu0 0
    %277 = vmatpush1.bf16.msra.mxu0 %v257
    %278 = vmatprep.subr.bf16.mxu0 0
    %279 = vmatpush1.bf16.msra.mxu0 %v258
    %280 = vmatprep.subr.bf16.mxu0 0
    %281 = vmatpush1.bf16.msra.mxu0 %v259
    %282 = vmatprep.subr.bf16.mxu0 0
    %283 = vmatpush1.bf16.msra.mxu0 %v260
    %284 = vmatprep.subr.bf16.mxu0 0
    %285 = vmatpush1.bf16.msra.mxu0 %v261
    %286 = vmatprep.subr.bf16.mxu0 0
    %287 = vmatpush1.bf16.msra.mxu0 0
    %288 = vmatprep.subr.bf16.mxu0 0
    %289 = vmatpush1.bf16.msra.mxu0 0
    %290 = vmatprep.subr.bf16.mxu0 0
    %291 = vmatpush1.bf16.msra.mxu0 0
    %292 = vmatprep.subr.bf16.mxu0 0
    %293 = vmatpush1.bf16.msra.mxu0 0
    %294 = vmatprep.subr.bf16.mxu0 0
    %295 = vmatpush1.bf16.msra.mxu0 0
    %296 = vmatprep.subr.bf16.mxu0 0
    %297 = vmatpush1.bf16.msra.mxu0 0
    %298 = vmatprep.subr.bf16.mxu0 0
    %299 = vmatpush1.bf16.msra.mxu0 0
    %300 = vmatprep.subr.bf16.mxu0 0
    %301 = vmatpush1.bf16.msra.mxu0 0
    %302 = vmatprep.mubr.bf16.mxu0 0
    %303 = vmatmul.mubr.bf16.gmra.mrb[0].mxu0 %v198
    %v304 = vpop.f32.mrb[0].mxu0
    %v305 = vadd.f32 %v220, %v304
    %v306 = vpop.f32.mrb[0].mxu0
    %v307 = vpop.f32.mrb[0].mxu0
    %v308 = vadd.f32 %v220, %v307
    %v309 = vpop.f32.mrb[0].mxu0
    %310 = vdwg.mxu0
    %v311 = vpack.c.bf16 %v308, %v305
    %v312 = vld [vmem:[#allocation8] sm:$0xf]
    %v313 = vld [vmem:[#allocation8 + $0x4] sm:$0xf]
    %v314 = vld [vmem:[#allocation8 + $0x8] sm:$0xf]
    %v315 = vld [vmem:[#allocation8 + $0xc] sm:$0xf]
    %v316 = vld [vmem:[#allocation8 + $0x10] sm:$0xf]
    %v317 = vld [vmem:[#allocation8 + $0x14] sm:$0xf]
    %v318 = vld [vmem:[#allocation8 + $0x18] sm:$0xf]
    %v319 = vld [vmem:[#allocation8 + $0x1c] sm:$0xf]
    %v320 = vld [vmem:[#allocation8 + $0x20] sm:$0xf]
    %v321 = vld [vmem:[#allocation8 + $0x24] sm:$0xf]
    %v322 = vld [vmem:[#allocation8 + $0x28] sm:$0xf]
    %v323 = vld [vmem:[#allocation8 + $0x2c] sm:$0xf]
    %v324 = vld [vmem:[#allocation8 + $0x30] sm:$0xf]
    %v325 = vld [vmem:[#allocation8 + $0x34] sm:$0xf]
    %v326 = vld [vmem:[#allocation8 + $0x38] sm:$0xf]
    %v327 = vld [vmem:[#allocation8 + $0x3c] sm:$0xf]
    %v328 = vld [vmem:[%s6] sm:$0x1]
    %v330 = vlaneseq
    %v331 = vshrl.u32 %v330, 7
    %v332 = vsub.s32 0, %v331
    %v333 = vrot.slane %v328, %v332
    %v351 = vunpack.c.l.b16 %v312
    %v352 = vunpack.c.l.b16 %v313
    %v353 = vunpack.c.l.b16 %v314
    %v354 = vunpack.c.l.b16 %v315
    %v355 = vunpack.c.l.b16 %v316
    %v356 = vunpack.c.l.b16 %v317
    %v357 = vunpack.c.l.b16 %v318
    %v358 = vunpack.c.l.b16 %v319
    %v359 = vunpack.c.l.b16 %v320
    %v360 = vunpack.c.l.b16 %v321
    %v361 = vunpack.c.l.b16 %v322
    %v362 = vunpack.c.l.b16 %v323
    %v363 = vunpack.c.l.b16 %v324
    %v364 = vunpack.c.l.b16 %v325
    %v365 = vunpack.c.l.b16 %v326
    %v366 = vunpack.c.l.b16 %v327
    %v367 = vpack.c.b16 %v352, %v351
    %v368 = vpack.c.b16 %v354, %v353
    %v369 = vpack.c.b16 %v356, %v355
    %v370 = vpack.c.b16 %v358, %v357
    %v371 = vpack.c.b16 %v360, %v359
    %v372 = vpack.c.b16 %v362, %v361
    %v373 = vpack.c.b16 %v364, %v363
    %v374 = vpack.c.b16 %v366, %v365
    %383 = vmatprep.subr.bf16.mxu0 0
    %384 = vmatpush1.bf16.msra.mxu0 %v367
    %385 = vmatprep.subr.bf16.mxu0 0
    %386 = vmatpush1.bf16.msra.mxu0 %v368
    %387 = vmatprep.subr.bf16.mxu0 0
    %388 = vmatpush1.bf16.msra.mxu0 %v369
    %389 = vmatprep.subr.bf16.mxu0 0
    %390 = vmatpush1.bf16.msra.mxu0 %v370
    %391 = vmatprep.subr.bf16.mxu0 0
    %392 = vmatpush1.bf16.msra.mxu0 %v371
    %393 = vmatprep.subr.bf16.mxu0 0
    %394 = vmatpush1.bf16.msra.mxu0 %v372
    %395 = vmatprep.subr.bf16.mxu0 0
    %396 = vmatpush1.bf16.msra.mxu0 %v373
    %397 = vmatprep.subr.bf16.mxu0 0
    %398 = vmatpush1.bf16.msra.mxu0 %v374
    %399 = vmatprep.subr.bf16.mxu0 0
    %400 = vmatpush1.bf16.msra.mxu0 0
    %401 = vmatprep.subr.bf16.mxu0 0
    %402 = vmatpush1.bf16.msra.mxu0 0
    %403 = vmatprep.subr.bf16.mxu0 0
    %404 = vmatpush1.bf16.msra.mxu0 0
    %405 = vmatprep.subr.bf16.mxu0 0
    %406 = vmatpush1.bf16.msra.mxu0 0
    %407 = vmatprep.subr.bf16.mxu0 0
    %408 = vmatpush1.bf16.msra.mxu0 0
    %409 = vmatprep.subr.bf16.mxu0 0
    %410 = vmatpush1.bf16.msra.mxu0 0
    %411 = vmatprep.subr.bf16.mxu0 0
    %412 = vmatpush1.bf16.msra.mxu0 0
    %413 = vmatprep.subr.bf16.mxu0 0
    %414 = vmatpush1.bf16.msra.mxu0 0
    %415 = vmatprep.mubr.bf16.mxu0 0
    %416 = vmatmul.mubr.bf16.gmra.mrb[0].mxu0 %v311
    %v417 = vpop.f32.mrb[0].mxu0
    %v418 = vadd.f32 %v333, %v417
    %v419 = vpop.f32.mrb[0].mxu0
    %v420 = vpop.f32.mrb[0].mxu0
    %v421 = vadd.f32 %v333, %v420
    %v422 = vpop.f32.mrb[0].mxu0
    %423 = vdwg.mxu0
    %424 = vst [vmem:[#allocation10] sm:$0xff] %v418
    %425 = vst [vmem:[#allocation10 + $0x8] sm:$0xff] %v421
    // Predicated region
    $region46: #{tpu_custom_call.1} parent=1 // pred_check
      _
    $region47: #{tpu_custom_call.1} parent=1 // pred_check_branch
      %427 = sbr.rel (0) target = $region49
    $region48: #{tpu_custom_call.1} parent=1 // pred_region
      %s429 = ssub.s32 256, 256
      %430 = vsyncadd [#allocation4], %s429
      %s431 = sshll.u32 [#allocation10], 4
      %s432 = int_to_ptr.vmem [resolvable:$true] %s431
      %437 = dma.vmem_to_hbm [thread:$0]  %s432, 256, %s7, [#allocation4], 128, 128, 8
    $region49: #{tpu_custom_call.1} parent=1 // pred_fallthru
      _
    // Predicated region
    $region50: #{tpu_custom_call.1} parent=1 // pred_check
      _
    $region51: #{tpu_custom_call.1} parent=1 // pred_check_branch
      %439 = sbr.rel (0) target = $region53
    $region52: #{tpu_custom_call.1} parent=1 // pred_region
      %440 = dma.done [#allocation4], 256
    $region53: #{tpu_custom_call.1} parent=1 // pred_fallthru
      _
    %441 = vsyncpa [#allocation3], 1
    %442 = vsyncpa [#allocation6], 1
    %443 = vsyncpa [#allocation9], 1
    %444 = vsyncpa [#allocation4], 1

// kernel: tpu_custom_call.1
$region0: #{tpu_custom_call.1}
  #allocation0 [shape = 'u32[]', space=smem, size = 0x4, offset = 0x4, fixed_abs, tag = 'smem constant byte address 0x4 - core index']
  #allocation1 [shape = 'u32[144,128]{1,0:T(1,128)}', space=vmem, size = 0x12000, scoped, tag = 'internal scratch']
  %s0 = inlined_call_operand.hbm [shape: f32[16,128], index: 0, kind: input, shape index: {}]
  %s1 = inlined_call_operand.hbm [shape: bf16[128,128], index: 1, kind: input, shape index: {}]
  %s2 = inlined_call_operand.vmem [shape: f32[1,128], index: 2, kind: input, shape index: {}]
  %s3 = inlined_call_operand.hbm [shape: bf16[128,128], index: 3, kind: input, shape index: {}]
  %s4 = inlined_call_operand.vmem [shape: f32[1,128], index: 4, kind: input, shape index: {}]
  %s5 = inlined_call_operand.hbm [shape: bf16[128,128], index: 5, kind: input, shape index: {}]
  %s6 = inlined_call_operand.vmem [shape: f32[1,128], index: 6, kind: input, shape index: {}]
  %s7 = inlined_call_operand.hbm [shape: f32[16,128], index: 7, kind: output, shape index: {}]
  %s8 = sld [smem:[#allocation0]]
  $region54: #{tpu_custom_call.1} parent=0
    _
  %s10 = ssub.s32 1, %s8
  %s11 = scalar_select 0, %s10, %s8
  $region1: #{tpu_custom_call.1} parent=0
    #allocation2 [shape = 'u8[8192]{0}', space=vmem, size = 0x2000, scoped, tag = 'input window, operand 0, single buffered']
    #allocation3 [shape = 's32[1]{0}', space=sflag, size = 0x4, scoped, tag = 'scoped memory for tpu_custom_call.1']
    #allocation4 [shape = 's32[1]{0}', space=sflag, size = 0x4, scoped, tag = 'scoped memory for tpu_custom_call.1']
    #allocation5 [shape = 'u8[32768]{0}', space=vmem, size = 0x8000, scoped, tag = 'input window, operand 1, single buffered']
    #allocation6 [shape = 's32[1]{0}', space=sflag, size = 0x4, scoped, tag = 'scoped memory for tpu_custom_call.1']
    #allocation7 [shape = 'u8[32768]{0}', space=vmem, size = 0x8000, scoped, tag = 'input window, operand 3, single buffered']
    #allocation8 [shape = 'u8[32768]{0}', space=vmem, size = 0x8000, scoped, tag = 'input window, operand 5, single buffered']
    #allocation9 [shape = 's32[1]{0}', space=sflag, size = 0x4, scoped, tag = 'scoped memory for tpu_custom_call.1']
    #allocation10 [shape = 'u8[8192]{0}', space=vmem, size = 0x2000, scoped, tag = 'output window, operand 0, single buffered']
    %12 = vsyncpa [#allocation3], 0
    %13 = vsyncpa [#allocation6], 0
    %14 = vsyncpa [#allocation9], 0
    %15 = vsyncpa [#allocation4], 0
    // Predicated region
    $region2: #{tpu_custom_call.1} parent=1 // pred_check
      _
    $region3: #{tpu_custom_call.1} parent=1 // pred_check_branch
      %17 = sbr.rel (0) target = $region5
    $region4: #{tpu_custom_call.1} parent=1 // pred_region
      %s19 = ssub.s32 256, 256
      %20 = vsyncadd [#allocation3], %s19
      %s21 = sshll.u32 [#allocation2], 4
      %s22 = int_to_ptr.vmem [resolvable:$true] %s21
      %27 = dma.hbm_to_vmem [thread:$0]  %s0, 256, %s22, [#allocation3], 128, 128, 8
    $region5: #{tpu_custom_call.1} parent=1 // pred_fallthru
      _
    // Predicated region
    $region6: #{tpu_custom_call.1} parent=1 // pred_check
      _
    $region7: #{tpu_custom_call.1} parent=1 // pred_check_branch
      %29 = sbr.rel (0) target = $region9
    $region8: #{tpu_custom_call.1} parent=1 // pred_region
      %s31 = ssub.s32 1024, 1024
      %32 = vsyncadd [#allocation6], %s31
      %s33 = sshll.u32 [#allocation5], 4
      %s34 = int_to_ptr.vmem [resolvable:$true] %s33
      %39 = dma.hbm_to_vmem [thread:$0]  %s1, 1024, %s34, [#allocation6], 64, 64, 4
    $region9: #{tpu_custom_call.1} parent=1 // pred_fallthru
      _
    // Predicated region
    $region10: #{tpu_custom_call.1} parent=1 // pred_check
      _
    $region11: #{tpu_custom_call.1} parent=1 // pred_check_branch
      %41 = sbr.rel (0) target = $region13
    $region12: #{tpu_custom_call.1} parent=1 // pred_region
      _
    $region13: #{tpu_custom_call.1} parent=1 // pred_fallthru
      _
    // Predicated region
    $region14: #{tpu_custom_call.1} parent=1 // pred_check
      _
    $region15: #{tpu_custom_call.1} parent=1 // pred_check_branch
      %43 = sbr.rel (0) target = $region17
    $region16: #{tpu_custom_call.1} parent=1 // pred_region
      %s45 = ssub.s32 1024, 1024
      %46 = vsyncadd [#allocation6], %s45
      %s47 = sshll.u32 [#allocation7], 4
      %s48 = int_to_ptr.vmem [resolvable:$true] %s47
      %53 = dma.hbm_to_vmem [thread:$0]  %s3, 1024, %s48, [#allocation6], 64, 64, 4
    $region17: #{tpu_custom_call.1} parent=1 // pred_fallthru
      _
    // Predicated region
    $region18: #{tpu_custom_call.1} parent=1 // pred_check
      _
    $region19: #{tpu_custom_call.1} parent=1 // pred_check_branch
      %55 = sbr.rel (0) target = $region21
    $region20: #{tpu_custom_call.1} parent=1 // pred_region
      _
    $region21: #{tpu_custom_call.1} parent=1 // pred_fallthru
      _
    // Predicated region
    $region22: #{tpu_custom_call.1} parent=1 // pred_check
      _
    $region23: #{tpu_custom_call.1} parent=1 // pred_check_branch
      %57 = sbr.rel (0) target = $region25
    $region24: #{tpu_custom_call.1} parent=1 // pred_region
      %s59 = ssub.s32 1024, 1024
      %60 = vsyncadd [#allocation9], %s59
      %s61 = sshll.u32 [#allocation8], 4
      %s62 = int_to_ptr.vmem [resolvable:$true] %s61
      %67 = dma.hbm_to_vmem [thread:$0]  %s5, 1024, %s62, [#allocation9], 64, 64, 4
    $region25: #{tpu_custom_call.1} parent=1 // pred_fallthru
      _
    // Predicated region
    $region26: #{tpu_custom_call.1} parent=1 // pred_check
      _
    $region27: #{tpu_custom_call.1} parent=1 // pred_check_branch
      %69 = sbr.rel (0) target = $region29
    $region28: #{tpu_custom_call.1} parent=1 // pred_region
      _
    $region29: #{tpu_custom_call.1} parent=1 // pred_fallthru
      _
    // Predicated region
    $region30: #{tpu_custom_call.1} parent=1 // pred_check
      _
    $region31: #{tpu_custom_call.1} parent=1 // pred_check_branch
      %71 = sbr.rel (0) target = $region33
    $region32: #{tpu_custom_call.1} parent=1 // pred_region
      %72 = dma.done [#allocation3], 256
    $region33: #{tpu_custom_call.1} parent=1 // pred_fallthru
      _
    // Predicated region
    $region34: #{tpu_custom_call.1} parent=1 // pred_check
      _
    $region35: #{tpu_custom_call.1} parent=1 // pred_check_branch
      %74 = sbr.rel (0) target = $region37
    $region36: #{tpu_custom_call.1} parent=1 // pred_region
      %75 = dma.done [#allocation6], 1024
    $region37: #{tpu_custom_call.1} parent=1 // pred_fallthru
      _
    // Predicated region
    $region38: #{tpu_custom_call.1} parent=1 // pred_check
      _
    $region39: #{tpu_custom_call.1} parent=1 // pred_check_branch
      %77 = sbr.rel (0) target = $region41
    $region40: #{tpu_custom_call.1} parent=1 // pred_region
      %78 = dma.done [#allocation6], 1024
    $region41: #{tpu_custom_call.1} parent=1 // pred_fallthru
      _
    // Predicated region
    $region42: #{tpu_custom_call.1} parent=1 // pred_check
      _
    $region43: #{tpu_custom_call.1} parent=1 // pred_check_branch
      %80 = sbr.rel (0) target = $region45
    $region44: #{tpu_custom_call.1} parent=1 // pred_region
      %81 = dma.done [#allocation9], 1024
    $region45: #{tpu_custom_call.1} parent=1 // pred_fallthru
      _
    %v83 = vld [vmem:[#allocation2] sm:$0xff]
    %v84 = vld [vmem:[#allocation2 + $0x8] sm:$0xff]
    %v85 = vpack.c.bf16 %v84, %v83
    %v86 = vld [vmem:[#allocation5] sm:$0xf]
    %v87 = vld [vmem:[#allocation5 + $0x4] sm:$0xf]
    %v88 = vld [vmem:[#allocation5 + $0x8] sm:$0xf]
    %v89 = vld [vmem:[#allocation5 + $0xc] sm:$0xf]
    %v90 = vld [vmem:[#allocation5 + $0x10] sm:$0xf]
    %v91 = vld [vmem:[#allocation5 + $0x14] sm:$0xf]
    %v92 = vld [vmem:[#allocation5 + $0x18] sm:$0xf]
    %v93 = vld [vmem:[#allocation5 + $0x1c] sm:$0xf]
    %v94 = vld [vmem:[#allocation5 + $0x20] sm:$0xf]
    %v95 = vld [vmem:[#allocation5 + $0x24] sm:$0xf]
    %v96 = vld [vmem:[#allocation5 + $0x28] sm:$0xf]
    %v97 = vld [vmem:[#allocation5 + $0x2c] sm:$0xf]
    %v98 = vld [vmem:[#allocation5 + $0x30] sm:$0xf]
    %v99 = vld [vmem:[#allocation5 + $0x34] sm:$0xf]
    %v100 = vld [vmem:[#allocation5 + $0x38] sm:$0xf]
    %v101 = vld [vmem:[#allocation5 + $0x3c] sm:$0xf]
    %v102 = vld [vmem:[%s2] sm:$0x1]
    %v104 = vlaneseq
    %v105 = vshrl.u32 %v104, 7
    %v106 = vsub.s32 0, %v105
    %v107 = vrot.slane %v102, %v106
    %v125 = vunpack.c.l.b16 %v86
    %v126 = vunpack.c.l.b16 %v87
    %v127 = vunpack.c.l.b16 %v88
    %v128 = vunpack.c.l.b16 %v89
    %v129 = vunpack.c.l.b16 %v90
    %v130 = vunpack.c.l.b16 %v91
    %v131 = vunpack.c.l.b16 %v92
    %v132 = vunpack.c.l.b16 %v93
    %v133 = vunpack.c.l.b16 %v94
    %v134 = vunpack.c.l.b16 %v95
    %v135 = vunpack.c.l.b16 %v96
    %v136 = vunpack.c.l.b16 %v97
    %v137 = vunpack.c.l.b16 %v98
    %v138 = vunpack.c.l.b16 %v99
    %v139 = vunpack.c.l.b16 %v100
    %v140 = vunpack.c.l.b16 %v101
    %v141 = vpack.c.b16 %v126, %v125
    %v142 = vpack.c.b16 %v128, %v127
    %v143 = vpack.c.b16 %v130, %v129
    %v144 = vpack.c.b16 %v132, %v131
    %v145 = vpack.c.b16 %v134, %v133
    %v146 = vpack.c.b16 %v136, %v135
    %v147 = vpack.c.b16 %v138, %v137
    %v148 = vpack.c.b16 %v140, %v139
    %157 = vmatprep.subr.bf16.mxu0 0
    %158 = vmatpush1.bf16.msra.mxu0 %v141
    %159 = vmatprep.subr.bf16.mxu0 0
    %160 = vmatpush1.bf16.msra.mxu0 %v142
    %161 = vmatprep.subr.bf16.mxu0 0
    %162 = vmatpush1.bf16.msra.mxu0 %v143
    %163 = vmatprep.subr.bf16.mxu0 0
    %164 = vmatpush1.bf16.msra.mxu0 %v144
    %165 = vmatprep.subr.bf16.mxu0 0
    %166 = vmatpush1.bf16.msra.mxu0 %v145
    %167 = vmatprep.subr.bf16.mxu0 0
    %168 = vmatpush1.bf16.msra.mxu0 %v146
    %169 = vmatprep.subr.bf16.mxu0 0
    %170 = vmatpush1.bf16.msra.mxu0 %v147
    %171 = vmatprep.subr.bf16.mxu0 0
    %172 = vmatpush1.bf16.msra.mxu0 %v148
    %173 = vmatprep.subr.bf16.mxu0 0
    %174 = vmatpush1.bf16.msra.mxu0 0
    %175 = vmatprep.subr.bf16.mxu0 0
    %176 = vmatpush1.bf16.msra.mxu0 0
    %177 = vmatprep.subr.bf16.mxu0 0
    %178 = vmatpush1.bf16.msra.mxu0 0
    %179 = vmatprep.subr.bf16.mxu0 0
    %180 = vmatpush1.bf16.msra.mxu0 0
    %181 = vmatprep.subr.bf16.mxu0 0
    %182 = vmatpush1.bf16.msra.mxu0 0
    %183 = vmatprep.subr.bf16.mxu0 0
    %184 = vmatpush1.bf16.msra.mxu0 0
    %185 = vmatprep.subr.bf16.mxu0 0
    %186 = vmatpush1.bf16.msra.mxu0 0
    %187 = vmatprep.subr.bf16.mxu0 0
    %188 = vmatpush1.bf16.msra.mxu0 0
    %189 = vmatprep.mubr.bf16.mxu0 0
    %190 = vmatmul.mubr.bf16.gmra.mrb[0].mxu0 %v85
    %v191 = vpop.f32.mrb[0].mxu0
    %v192 = vadd.f32 %v107, %v191
    %v193 = vpop.f32.mrb[0].mxu0
    %v194 = vpop.f32.mrb[0].mxu0
    %v195 = vadd.f32 %v107, %v194
    %v196 = vpop.f32.mrb[0].mxu0
    %197 = vdwg.mxu0
    %v198 = vpack.c.bf16 %v195, %v192
    %v199 = vld [vmem:[#allocation7] sm:$0xf]
    %v200 = vld [vmem:[#allocation7 + $0x4] sm:$0xf]
    %v201 = vld [vmem:[#allocation7 + $0x8] sm:$0xf]
    %v202 = vld [vmem:[#allocation7 + $0xc] sm:$0xf]
    %v203 = vld [vmem:[#allocation7 + $0x10] sm:$0xf]
    %v204 = vld [vmem:[#allocation7 + $0x14] sm:$0xf]
    %v205 = vld [vmem:[#allocation7 + $0x18] sm:$0xf]
    %v206 = vld [vmem:[#allocation7 + $0x1c] sm:$0xf]
    %v207 = vld [vmem:[#allocation7 + $0x20] sm:$0xf]
    %v208 = vld [vmem:[#allocation7 + $0x24] sm:$0xf]
    %v209 = vld [vmem:[#allocation7 + $0x28] sm:$0xf]
    %v210 = vld [vmem:[#allocation7 + $0x2c] sm:$0xf]
    %v211 = vld [vmem:[#allocation7 + $0x30] sm:$0xf]
    %v212 = vld [vmem:[#allocation7 + $0x34] sm:$0xf]
    %v213 = vld [vmem:[#allocation7 + $0x38] sm:$0xf]
    %v214 = vld [vmem:[#allocation7 + $0x3c] sm:$0xf]
    %v215 = vld [vmem:[%s4] sm:$0x1]
    %v217 = vlaneseq
    %v218 = vshrl.u32 %v217, 7
    %v219 = vsub.s32 0, %v218
    %v220 = vrot.slane %v215, %v219
    %v238 = vunpack.c.l.b16 %v199
    %v239 = vunpack.c.l.b16 %v200
    %v240 = vunpack.c.l.b16 %v201
    %v241 = vunpack.c.l.b16 %v202
    %v242 = vunpack.c.l.b16 %v203
    %v243 = vunpack.c.l.b16 %v204
    %v244 = vunpack.c.l.b16 %v205
    %v245 = vunpack.c.l.b16 %v206
    %v246 = vunpack.c.l.b16 %v207
    %v247 = vunpack.c.l.b16 %v208
    %v248 = vunpack.c.l.b16 %v209
    %v249 = vunpack.c.l.b16 %v210
    %v250 = vunpack.c.l.b16 %v211
    %v251 = vunpack.c.l.b16 %v212
    %v252 = vunpack.c.l.b16 %v213
    %v253 = vunpack.c.l.b16 %v214
    %v254 = vpack.c.b16 %v239, %v238
    %v255 = vpack.c.b16 %v241, %v240
    %v256 = vpack.c.b16 %v243, %v242
    %v257 = vpack.c.b16 %v245, %v244
    %v258 = vpack.c.b16 %v247, %v246
    %v259 = vpack.c.b16 %v249, %v248
    %v260 = vpack.c.b16 %v251, %v250
    %v261 = vpack.c.b16 %v253, %v252
    %270 = vmatprep.subr.bf16.mxu0 0
    %271 = vmatpush1.bf16.msra.mxu0 %v254
    %272 = vmatprep.subr.bf16.mxu0 0
    %273 = vmatpush1.bf16.msra.mxu0 %v255
    %274 = vmatprep.subr.bf16.mxu0 0
    %275 = vmatpush1.bf16.msra.mxu0 %v256
    %276 = vmatprep.subr.bf16.mxu0 0
    %277 = vmatpush1.bf16.msra.mxu0 %v257
    %278 = vmatprep.subr.bf16.mxu0 0
    %279 = vmatpush1.bf16.msra.mxu0 %v258
    %280 = vmatprep.subr.bf16.mxu0 0
    %281 = vmatpush1.bf16.msra.mxu0 %v259
    %282 = vmatprep.subr.bf16.mxu0 0
    %283 = vmatpush1.bf16.msra.mxu0 %v260
    %284 = vmatprep.subr.bf16.mxu0 0
    %285 = vmatpush1.bf16.msra.mxu0 %v261
    %286 = vmatprep.subr.bf16.mxu0 0
    %287 = vmatpush1.bf16.msra.mxu0 0
    %288 = vmatprep.subr.bf16.mxu0 0
    %289 = vmatpush1.bf16.msra.mxu0 0
    %290 = vmatprep.subr.bf16.mxu0 0
    %291 = vmatpush1.bf16.msra.mxu0 0
    %292 = vmatprep.subr.bf16.mxu0 0
    %293 = vmatpush1.bf16.msra.mxu0 0
    %294 = vmatprep.subr.bf16.mxu0 0
    %295 = vmatpush1.bf16.msra.mxu0 0
    %296 = vmatprep.subr.bf16.mxu0 0
    %297 = vmatpush1.bf16.msra.mxu0 0
    %298 = vmatprep.subr.bf16.mxu0 0
    %299 = vmatpush1.bf16.msra.mxu0 0
    %300 = vmatprep.subr.bf16.mxu0 0
    %301 = vmatpush1.bf16.msra.mxu0 0
    %302 = vmatprep.mubr.bf16.mxu0 0
    %303 = vmatmul.mubr.bf16.gmra.mrb[0].mxu0 %v198
    %v304 = vpop.f32.mrb[0].mxu0
    %v305 = vadd.f32 %v220, %v304
    %v306 = vpop.f32.mrb[0].mxu0
    %v307 = vpop.f32.mrb[0].mxu0
    %v308 = vadd.f32 %v220, %v307
    %v309 = vpop.f32.mrb[0].mxu0
    %310 = vdwg.mxu0
    %v311 = vpack.c.bf16 %v308, %v305
    %v312 = vld [vmem:[#allocation8] sm:$0xf]
    %v313 = vld [vmem:[#allocation8 + $0x4] sm:$0xf]
    %v314 = vld [vmem:[#allocation8 + $0x8] sm:$0xf]
    %v315 = vld [vmem:[#allocation8 + $0xc] sm:$0xf]
    %v316 = vld [vmem:[#allocation8 + $0x10] sm:$0xf]
    %v317 = vld [vmem:[#allocation8 + $0x14] sm:$0xf]
    %v318 = vld [vmem:[#allocation8 + $0x18] sm:$0xf]
    %v319 = vld [vmem:[#allocation8 + $0x1c] sm:$0xf]
    %v320 = vld [vmem:[#allocation8 + $0x20] sm:$0xf]
    %v321 = vld [vmem:[#allocation8 + $0x24] sm:$0xf]
    %v322 = vld [vmem:[#allocation8 + $0x28] sm:$0xf]
    %v323 = vld [vmem:[#allocation8 + $0x2c] sm:$0xf]
    %v324 = vld [vmem:[#allocation8 + $0x30] sm:$0xf]
    %v325 = vld [vmem:[#allocation8 + $0x34] sm:$0xf]
    %v326 = vld [vmem:[#allocation8 + $0x38] sm:$0xf]
    %v327 = vld [vmem:[#allocation8 + $0x3c] sm:$0xf]
    %v328 = vld [vmem:[%s6] sm:$0x1]
    %v330 = vlaneseq
    %v331 = vshrl.u32 %v330, 7
    %v332 = vsub.s32 0, %v331
    %v333 = vrot.slane %v328, %v332
    %v351 = vunpack.c.l.b16 %v312
    %v352 = vunpack.c.l.b16 %v313
    %v353 = vunpack.c.l.b16 %v314
    %v354 = vunpack.c.l.b16 %v315
    %v355 = vunpack.c.l.b16 %v316
    %v356 = vunpack.c.l.b16 %v317
    %v357 = vunpack.c.l.b16 %v318
    %v358 = vunpack.c.l.b16 %v319
    %v359 = vunpack.c.l.b16 %v320
    %v360 = vunpack.c.l.b16 %v321
    %v361 = vunpack.c.l.b16 %v322
    %v362 = vunpack.c.l.b16 %v323
    %v363 = vunpack.c.l.b16 %v324
    %v364 = vunpack.c.l.b16 %v325
    %v365 = vunpack.c.l.b16 %v326
    %v366 = vunpack.c.l.b16 %v327
    %v367 = vpack.c.b16 %v352, %v351
    %v368 = vpack.c.b16 %v354, %v353
    %v369 = vpack.c.b16 %v356, %v355
    %v370 = vpack.c.b16 %v358, %v357
    %v371 = vpack.c.b16 %v360, %v359
    %v372 = vpack.c.b16 %v362, %v361
    %v373 = vpack.c.b16 %v364, %v363
    %v374 = vpack.c.b16 %v366, %v365
    %383 = vmatprep.subr.bf16.mxu0 0
    %384 = vmatpush1.bf16.msra.mxu0 %v367
    %385 = vmatprep.subr.bf16.mxu0 0
    %386 = vmatpush1.bf16.msra.mxu0 %v368
    %387 = vmatprep.subr.bf16.mxu0 0
    %388 = vmatpush1.bf16.msra.mxu0 %v369
    %389 = vmatprep.subr.bf16.mxu0 0
    %390 = vmatpush1.bf16.msra.mxu0 %v370
    %391 = vmatprep.subr.bf16.mxu0 0
    %392 = vmatpush1.bf16.msra.mxu0 %v371
    %393 = vmatprep.subr.bf16.mxu0 0
    %394 = vmatpush1.bf16.msra.mxu0 %v372
    %395 = vmatprep.subr.bf16.mxu0 0
    %396 = vmatpush1.bf16.msra.mxu0 %v373
    %397 = vmatprep.subr.bf16.mxu0 0
    %398 = vmatpush1.bf16.msra.mxu0 %v374
    %399 = vmatprep.subr.bf16.mxu0 0
    %400 = vmatpush1.bf16.msra.mxu0 0
    %401 = vmatprep.subr.bf16.mxu0 0
    %402 = vmatpush1.bf16.msra.mxu0 0
    %403 = vmatprep.subr.bf16.mxu0 0
    %404 = vmatpush1.bf16.msra.mxu0 0
    %405 = vmatprep.subr.bf16.mxu0 0
    %406 = vmatpush1.bf16.msra.mxu0 0
    %407 = vmatprep.subr.bf16.mxu0 0
    %408 = vmatpush1.bf16.msra.mxu0 0
    %409 = vmatprep.subr.bf16.mxu0 0
    %410 = vmatpush1.bf16.msra.mxu0 0
    %411 = vmatprep.subr.bf16.mxu0 0
    %412 = vmatpush1.bf16.msra.mxu0 0
    %413 = vmatprep.subr.bf16.mxu0 0
    %414 = vmatpush1.bf16.msra.mxu0 0
    %415 = vmatprep.mubr.bf16.mxu0 0
    %416 = vmatmul.mubr.bf16.gmra.mrb[0].mxu0 %v311
    %v417 = vpop.f32.mrb[0].mxu0
    %v418 = vadd.f32 %v333, %v417
    %v419 = vpop.f32.mrb[0].mxu0
    %v420 = vpop.f32.mrb[0].mxu0
    %v421 = vadd.f32 %v333, %v420
    %v422 = vpop.f32.mrb[0].mxu0
    %423 = vdwg.mxu0
    %424 = vst [vmem:[#allocation10] sm:$0xff] %v418
    %425 = vst [vmem:[#allocation10 + $0x8] sm:$0xff] %v421
    // Predicated region
    $region46: #{tpu_custom_call.1} parent=1 // pred_check
      _
    $region47: #{tpu_custom_call.1} parent=1 // pred_check_branch
      %427 = sbr.rel (0) target = $region49
    $region48: #{tpu_custom_call.1} parent=1 // pred_region
      %s429 = ssub.s32 256, 256
      %430 = vsyncadd [#allocation4], %s429
      %s431 = sshll.u32 [#allocation10], 4
      %s432 = int_to_ptr.vmem [resolvable:$true] %s431
      %437 = dma.vmem_to_hbm [thread:$0]  %s432, 256, %s7, [#allocation4], 128, 128, 8
    $region49: #{tpu_custom_call.1} parent=1 // pred_fallthru
      _
    // Predicated region
    $region50: #{tpu_custom_call.1} parent=1 // pred_check
      _
    $region51: #{tpu_custom_call.1} parent=1 // pred_check_branch
      %439 = sbr.rel (0) target = $region53
    $region52: #{tpu_custom_call.1} parent=1 // pred_region
      %440 = dma.done [#allocation4], 256
    $region53: #{tpu_custom_call.1} parent=1 // pred_fallthru
      _
    %441 = vsyncpa [#allocation3], 1
    %442 = vsyncpa [#allocation6], 1
    %443 = vsyncpa [#allocation9], 1
    %444 = vsyncpa [#allocation4], 1

</llo_original>
